<compile_context>
chip_gen: v5e
topology: v5e:2x2
jax: 0.10.0
libtpu: 0.0.40
codegen_flags: <defaults>
</compile_context>

<pallas_src>
import functools
import math

import jax
import jax.numpy as jnp
import numpy as np
from jax.experimental import pallas as pl
from jax.experimental.pallas import tpu as pltpu


def _round_up(a, b):
    return ((a + b - 1) // b) * b


def _pick_tile_n(n_pad):
    # largest row tile that divides n_pad (amortizes per-grid-step overhead)
    for t in (512, 384, 256, 128):
        if n_pad % t == 0:
            return t
    return 128


def _use_bf16_exp():
    # bf16 EUP/VALU exist on v6e / v7x; keep f32 exp on v5 and older.
    try:
        kind = jax.devices()[0].device_kind.lower()
    except Exception:
        return False
    return not any(tag in kind for tag in ("v2", "v3", "v4", "v5"))


# ---------------------------------------------------------------------------
# Kernel 1: fused Q/K/V/skip projection (single wide matmul on the MXU).
# ---------------------------------------------------------------------------
def _fused_proj_kernel(x_ref, w_ref, b_ref, qkv_ref, skip_ref, *, qkv_cols):
    x = x_ref[...]                                         # [Tn, dim_in]   bf16
    res = jnp.dot(x, w_ref[...],
                  preferred_element_type=jnp.float32) + b_ref[...]
    qkv_ref[...] = res[:, :qkv_cols].astype(qkv_ref.dtype)   # 384 lanes, dense
    skip_ref[...] = res[:, qkv_cols:]                         # 128 lanes, dense


def fused_projection_pallas(x_bf16, w_fused, b_fused, *, qkv_cols, skip_cols,
                            tile_n):
    n_pad, dim_in = x_bf16.shape
    wout = qkv_cols + skip_cols
    kernel = functools.partial(_fused_proj_kernel, qkv_cols=qkv_cols)
    flops = 2 * n_pad * dim_in * wout
    bytes_accessed = (n_pad * dim_in * 2 + dim_in * wout * 2 + wout * 4
                      + n_pad * (qkv_cols * 2 + skip_cols * 4))
    return pl.pallas_call(
        kernel,
        out_shape=(jax.ShapeDtypeStruct((n_pad, qkv_cols), jnp.bfloat16),
                   jax.ShapeDtypeStruct((n_pad, skip_cols), jnp.float32)),
        grid=(n_pad // tile_n,),
        in_specs=[
            pl.BlockSpec((tile_n, dim_in), lambda i: (i, 0)),
            pl.BlockSpec((dim_in, wout), lambda i: (0, 0)),
            pl.BlockSpec((1, wout), lambda i: (0, 0)),
        ],
        out_specs=(
            pl.BlockSpec((tile_n, qkv_cols), lambda i: (i, 0)),
            pl.BlockSpec((tile_n, skip_cols), lambda i: (i, 0)),
        ),
        compiler_params=pltpu.CompilerParams(
            dimension_semantics=("parallel",)),
        cost_estimate=pl.CostEstimate(flops=int(flops), transcendentals=0,
                                      bytes_accessed=int(bytes_accessed)),
    )(x_bf16, w_fused, b_fused)


# ---------------------------------------------------------------------------
# Kernel 2: block-sparse flash attention with online softmax.
# Output: per-head *normalized* messages, lane-dense [Tq, heads*dim_out].
# ---------------------------------------------------------------------------
def _flash_attn_kernel(ktab_ref, cnt_ref, q_ref, k_ref, v_ref, mask_ref,
                       msg_ref, m_sc, l_sc, acc_sc, *, heads, dim_out,
                       use_bf16_exp):
    qi = pl.program_id(0)
    j = pl.program_id(1)

    @pl.when(j == 0)
    def _():
        m_sc[...] = jnp.full(m_sc.shape, -1e30, m_sc.dtype)
        l_sc[...] = jnp.zeros(l_sc.shape, l_sc.dtype)
        acc_sc[...] = jnp.zeros(acc_sc.shape, acc_sc.dtype)

    # block-sparse skip: padded steps (j >= cnt[qi]) do no work and (because
    # their index_map repeats the previous k-tile index) trigger no DMA.
    @pl.when(j < cnt_ref[qi])
    def _():
        mask = mask_ref[...] > 0                               # [Tq, Tk] bool
        # additive bias hoisted out of the head loop (one select per tile);
        # softmax scale already folded into Wq -> no per-tile multiply.
        bias = jnp.where(mask, jnp.float32(0.0), jnp.float32(-1e30))

        for h in range(heads):                                 # static unroll
            qh = q_ref[h]                                      # [Tq, d]  bf16
            kh = k_ref[h]                                      # [Tk, d]  bf16
            vh = v_ref[h]

            # contract last dims directly — no transpose materialization
            s = jax.lax.dot_general(qh, kh, (((1,), (1,)), ((), ())),
                                    preferred_element_type=jnp.float32)
            s = s + bias                                       # [Tq, Tk] f32

            m_prev = m_sc[h]                                   # [Tq, 1]
            m_new = jnp.maximum(m_prev, jnp.max(s, axis=-1, keepdims=True))
            alpha = jnp.exp(m_prev - m_new)
            if use_bf16_exp:
                # v6e/v7x: bf16 EUP/VALU — p feeds a bf16 matmul anyway
                p = jnp.exp((s - m_new).astype(jnp.bfloat16))
                l_add = jnp.sum(p.astype(jnp.float32), axis=-1, keepdims=True)
                p_mm = p
            else:
                p32 = jnp.exp(s - m_new)
                l_add = jnp.sum(p32, axis=-1, keepdims=True)
                p_mm = p32.astype(vh.dtype)
            l_sc[h] = alpha * l_sc[h] + l_add
            pv = jax.lax.dot_general(p_mm, vh, (((1,), (0,)), ((), ())),
                                     preferred_element_type=jnp.float32)
            acc_sc[h] = alpha * acc_sc[h] + pv
            m_sc[h] = m_new

    @pl.when(j == pl.num_programs(1) - 1)
    def _():
        pieces = []
        for h in range(heads):
            l_h = l_sc[h]
            inv = jnp.where(l_h > 0.0, pl.reciprocal(l_h, approx=True),
                            jnp.float32(0.0))
            pieces.append(acc_sc[h] * inv)
        msg_ref[...] = jnp.concatenate(pieces, axis=-1)        # lane-dense store


def flash_bipartite_attention_pallas(q_hm, k_hm, v_hm, mask, ktab, cnt, *,
                                     heads, dim_out, tile_q, tile_k,
                                     nnz_steps, use_bf16_exp):
    _, n_pad, _ = q_hm.shape
    hd = heads * dim_out
    nq = n_pad // tile_q
    max_cnt = ktab.shape[1]

    kernel = functools.partial(_flash_attn_kernel, heads=heads,
                               dim_out=dim_out, use_bf16_exp=use_bf16_exp)
    steps = max(nnz_steps, 1)
    flops = 4 * heads * dim_out * tile_q * tile_k * steps
    transcendentals = heads * tile_q * tile_k * steps
    bytes_accessed = (steps * (tile_q * tile_k + 2 * heads * tile_k * dim_out * 2)
                      + nq * (heads * tile_q * dim_out * 2 + tile_q * hd * 4))

    grid_spec = pltpu.PrefetchScalarGridSpec(
        num_scalar_prefetch=2,                  # ktab, cnt -> SMEM
        grid=(nq, max_cnt),
        in_specs=[
            pl.BlockSpec((heads, tile_q, dim_out),
                         lambda qi, j, ktab, cnt: (0, qi, 0)),
            pl.BlockSpec((heads, tile_k, dim_out),
                         lambda qi, j, ktab, cnt: (0, ktab[qi, j], 0)),
            pl.BlockSpec((heads, tile_k, dim_out),
                         lambda qi, j, ktab, cnt: (0, ktab[qi, j], 0)),
            pl.BlockSpec((tile_q, tile_k),
                         lambda qi, j, ktab, cnt: (qi, ktab[qi, j])),
        ],
        out_specs=pl.BlockSpec((tile_q, hd),
                               lambda qi, j, ktab, cnt: (qi, 0)),
        scratch_shapes=[
            pltpu.VMEM((heads, tile_q, 1), jnp.float32),        # running max
            pltpu.VMEM((heads, tile_q, 1), jnp.float32),        # running denom
            pltpu.VMEM((heads, tile_q, dim_out), jnp.float32),  # running acc
        ],
    )
    return pl.pallas_call(
        kernel,
        out_shape=jax.ShapeDtypeStruct((n_pad, hd), jnp.float32),
        grid_spec=grid_spec,
        compiler_params=pltpu.CompilerParams(
            dimension_semantics=("parallel", "arbitrary"),
            # right-sized: actual pipelined footprint is ~2-3 MiB at tile 128;
            # 16 MiB leaves ample headroom and stays far below v7x's 64 MiB.
            vmem_limit_bytes=16 * 1024 * 1024),
        cost_estimate=pl.CostEstimate(flops=int(flops),
                                      transcendentals=int(transcendentals),
                                      bytes_accessed=int(bytes_accessed)),
    )(ktab, cnt, q_hm, k_hm, v_hm, mask)


# ---------------------------------------------------------------------------
# Host-side (trace-time) graph preprocessing.
# ---------------------------------------------------------------------------
def _build_mask_np(u2v_li, num_q, size):
    # mask[i, j] = 1 iff edge j -> i exists (PyG source_to_target flow),
    # symmetric over the two bipartite directions exactly as the module builds.
    rows, cols = [], []
    for u, vs in u2v_li.items():
        for v in vs:
            rows.append(v + num_q); cols.append(u)
            rows.append(u); cols.append(v + num_q)
    mask = np.zeros((size, size), dtype=np.int8)
    if rows:
        mask[np.asarray(rows), np.asarray(cols)] = 1
    return mask


def _build_sparsity(u2v_li, num_q, n_pad, tile_q, tile_k):
    mask = _build_mask_np(u2v_li, num_q, n_pad)
    nq = n_pad // tile_q
    nk = n_pad // tile_k
    tile_nnz = mask.reshape(nq, tile_q, nk, tile_k).sum(axis=(1, 3)) > 0
    cnt = tile_nnz.sum(axis=1).astype(np.int32)            # nonzero k-tiles per q-tile
    max_cnt = max(1, int(cnt.max()))
    ktab = np.zeros((nq, max_cnt), dtype=np.int32)
    for qi in range(nq):
        nz = np.nonzero(tile_nnz[qi])[0].astype(np.int32)
        if nz.size:
            ktab[qi, :nz.size] = nz
            ktab[qi, nz.size:] = nz[-1]    # repeat last index -> no DMA on padded steps
    row_valid = (mask.sum(axis=1) > 0).astype(np.float32)[:, None]
    return (jnp.asarray(mask), jnp.asarray(ktab), jnp.asarray(cnt),
            jnp.asarray(row_valid), int(cnt.sum()))


# ---------------------------------------------------------------------------
# Module-level forward (mirrors OurGMNCustomInter.forward).
# ---------------------------------------------------------------------------
def our_gmn_custom_inter_forward(xq, xt, u2v_li, params, *, heads, dim_out,
                                 tile=128):
    num_q, _ = xq.shape
    num_t = xt.shape[0]
    n = num_q + num_t
    hd = heads * dim_out
    n_pad = max(_round_up(n, tile), tile)
    skip_cols = _round_up(dim_out, 128)

    x = jnp.concatenate([xq, xt], axis=0)
    x_pad = jnp.pad(x, ((0, n_pad - n), (0, 0))).astype(jnp.bfloat16)

    # fold 1/sqrt(d) softmax scale into Wq/bq; pad Wskip to 128 lane-dense cols
    scale = 1.0 / math.sqrt(dim_out)
    wskip_p = jnp.pad(params["wskip"], ((0, 0), (0, skip_cols - dim_out)))
    bskip_p = jnp.pad(params["bskip"], ((0, 0), (0, skip_cols - dim_out)))
    w_fused = jnp.concatenate(
        [params["wq"] * scale, params["wk"], params["wv"], wskip_p],
        axis=1).astype(jnp.bfloat16)
    b_fused = jnp.concatenate(
        [params["bq"] * scale, params["bk"], params["bv"], bskip_p],
        axis=1).astype(jnp.float32)

    qkv, skip_p = fused_projection_pallas(
        x_pad, w_fused, b_fused, qkv_cols=3 * hd, skip_cols=skip_cols,
        tile_n=_pick_tile_n(n_pad))
    skip = skip_p[:, :dim_out]

    # head-major q/k/v so the attention kernel does only first-axis indexing
    qkv_hm = qkv.reshape(n_pad, 3, heads, dim_out).transpose(1, 2, 0, 3)
    q_hm, k_hm, v_hm = qkv_hm[0], qkv_hm[1], qkv_hm[2]

    mask, ktab, cnt, row_valid, nnz_steps = _build_sparsity(
        u2v_li, num_q, n_pad, tile, tile)

    msgs = flash_bipartite_attention_pallas(
        q_hm, k_hm, v_hm, mask, ktab, cnt, heads=heads, dim_out=dim_out,
        tile_q=tile, tile_k=tile, nnz_steps=nnz_steps,
        use_bf16_exp=_use_bf16_exp())

    # tiny epilogue kept outside the kernel so the kernel store stays lane-dense;
    # row_valid zeroes isolated rows (PyG: no incoming edges -> message = 0).
    out = msgs.reshape(n_pad, heads, dim_out).mean(axis=1) * row_valid + skip
    out = out[:n]
    return out[:num_q], out[num_q:]


# ---------------------------------------------------------------------------
# Pure-JAX reference (matching the kernel's bf16 MXU-operand casts).
# ---------------------------------------------------------------------------
def _reference_forward(x, mask_bool, params, *, heads, dim_out):
    bf16, f32 = jnp.bfloat16, jnp.float32
    scale = 1.0 / math.sqrt(dim_out)
    xb = x.astype(bf16)

    def proj(w, b):
        return jnp.dot(xb, w.astype(bf16), preferred_element_type=f32) + b

    q = proj(params["wq"] * scale, params["bq"] * scale).astype(bf16)
    k = proj(params["wk"], params["bk"]).astype(bf16)
    v = proj(params["wv"], params["bv"]).astype(bf16)
    skip = proj(params["wskip"], params["bskip"])

    n = x.shape[0]
    qh = q.reshape(n, heads, dim_out)
    kh = k.reshape(n, heads, dim_out)
    vh = v.reshape(n, heads, dim_out)
    s = jnp.einsum("ihd,jhd->hij", qh, kh, preferred_element_type=f32)
    m = mask_bool[None, :, :]
    s = jnp.where(m, s, -1e30)
    s = s - jnp.max(s, axis=-1, keepdims=True)
    p = jnp.where(m, jnp.exp(s), 0.0)                        # [h, i, j]
    denom = jnp.sum(p, axis=-1, keepdims=True)               # [h, i, 1]
    msg = jnp.einsum("hij,jhd->ihd", p.astype(bf16), vh,
                     preferred_element_type=f32)             # [i, h, d]
    inv = jnp.where(denom > 0, 1.0 / denom, 0.0)
    msg = msg * jnp.transpose(inv, (1, 0, 2))
    return msg.mean(axis=1) + skip


def _init_params(key, dim_in, dim_out, heads):
    hd = heads * dim_out
    keys = jax.random.split(key, 8)
    s_in = 1.0 / (dim_in ** 0.5)
    return {
        "wq": jax.random.normal(keys[0], (dim_in, hd), jnp.float32) * s_in,
        "bq": jax.random.normal(keys[1], (1, hd), jnp.float32) * 0.01,
        "wk": jax.random.normal(keys[2], (dim_in, hd), jnp.float32) * s_in,
        "bk": jax.random.normal(keys[3], (1, hd), jnp.float32) * 0.01,
        "wv": jax.random.normal(keys[4], (dim_in, hd), jnp.float32) * s_in,
        "bv": jax.random.normal(keys[5], (1, hd), jnp.float32) * 0.01,
        "wskip": jax.random.normal(keys[6], (dim_in, dim_out), jnp.float32) * s_in,
        "bskip": jax.random.normal(keys[7], (1, dim_out), jnp.float32) * 0.01,
    }


def _run_and_check(key, num_q, num_t, dim_in, dim_out, heads, u2v_li):
    kq, kt, kp = jax.random.split(key, 3)
    xq = jax.random.normal(kq, (num_q, dim_in), jnp.float32)
    xt = jax.random.normal(kt, (num_t, dim_in), jnp.float32)
    params = _init_params(kp, dim_in, dim_out, heads)

    xq_out, xt_out = our_gmn_custom_inter_forward(
        xq, xt, u2v_li, params, heads=heads, dim_out=dim_out)
    jax.block_until_ready((xq_out, xt_out))

    n = num_q + num_t
    mask_bool = jnp.asarray(_build_mask_np(u2v_li, num_q, n)) > 0
    ref = _reference_forward(jnp.concatenate([xq, xt], axis=0), mask_bool,
                             params, heads=heads, dim_out=dim_out)
    got = jnp.concatenate([xq_out, xt_out], axis=0)
    np.testing.assert_allclose(np.asarray(got), np.asarray(ref),
                               rtol=2e-2, atol=2e-2)


if __name__ == "__main__":
    dim_in, dim_out, heads = 32, 32, 4
    key = jax.random.PRNGKey(0)
    k1, k2 = jax.random.split(key)

    # small case (N=16, padded to a single 128x128 tile); some nodes isolated
    u2v_small = {0: [0, 1], 1: [2], 2: [1, 3, 4], 3: [5], 4: [0, 5], 5: [6]}
    _run_and_check(k1, 8, 8, dim_in, dim_out, heads, u2v_small)

    # larger case: N=320 -> padded to 384; exercises the block-sparse
    # multi-tile online softmax and the parallel/arbitrary grid axes.
    num_q2, num_t2 = 150, 170
    rng = np.random.default_rng(0)
    u2v_large = {}
    for u in range(num_q2):
        deg = int(rng.integers(0, 4))
        if deg:
            u2v_large[u] = [int(t) for t in
                            np.unique(rng.integers(0, num_t2, size=deg))]
    _run_and_check(k2, num_q2, num_t2, dim_in, dim_out, heads, u2v_large)

    print("KERNEL_OK")
</pallas_src>

<mosaic_0001>
module attributes {stable_mosaic.version = 11 : i64} {
  func.func @_fused_proj_kernel(%arg0: i32, %arg1: memref<128x32xbf16, #tpu.memory_space<vmem>>, %arg2: memref<32x512xbf16, #tpu.memory_space<vmem>>, %arg3: memref<1x512xf32, #tpu.memory_space<vmem>>, %arg4: memref<128x384xbf16, #tpu.memory_space<vmem>>, %arg5: memref<128x128xf32, #tpu.memory_space<vmem>>) attributes {dimension_semantics = [#tpu.dimension_semantics<parallel>], iteration_bounds = array<i64: 1>, scalar_prefetch = 0 : i64, scratch_operands = 0 : i64, tpu.core_type = #tpu.core_type<tc>, window_params = [{transform_indices = @transform_0, window_bounds = array<i64: 128, 32>}, {pipeline_mode = #tpu.pipeline_mode<synchronous>, transform_indices = @transform_1, window_bounds = array<i64: 32, 512>}, {pipeline_mode = #tpu.pipeline_mode<synchronous>, transform_indices = @transform_2, window_bounds = array<i64: 1, 512>}, {transform_indices = @transform_3, window_bounds = array<i64: 128, 384>}, {transform_indices = @transform_4, window_bounds = array<i64: 128, 128>}]} {
    %c0 = arith.constant 0 : index
    %c0_0 = arith.constant 0 : index
    %0 = vector.load %arg1[%c0, %c0_0] : memref<128x32xbf16, #tpu.memory_space<vmem>>, vector<128x32xbf16>
    %c0_1 = arith.constant 0 : index
    %c0_2 = arith.constant 0 : index
    %1 = vector.load %arg2[%c0_1, %c0_2] : memref<32x512xbf16, #tpu.memory_space<vmem>>, vector<32x512xbf16>
    %cst = arith.constant dense<0.000000e+00> : vector<128x512xf32>
    %2 = tpu.matmul %0, %1, %cst {dimension_numbers = #tpu.dot_dimension_numbers<[1], [0], [0], [1], [0, 0, 1, 1], [], []>} : vector<128x32xbf16>, vector<32x512xbf16>, vector<128x512xf32> -> vector<128x512xf32>
    %c0_3 = arith.constant 0 : index
    %c0_4 = arith.constant 0 : index
    %3 = vector.load %arg3[%c0_3, %c0_4] : memref<1x512xf32, #tpu.memory_space<vmem>>, vector<1x512xf32>
    %4 = vector.broadcast %3 : vector<1x512xf32> to vector<128x512xf32>
    %5 = arith.addf %2, %4 : vector<128x512xf32>
    %6 = vector.extract_strided_slice %5 {offsets = [0, 0], sizes = [128, 384], strides = [1, 1]} : vector<128x512xf32> to vector<128x384xf32>
    %7 = arith.truncf %6 : vector<128x384xf32> to vector<128x384xbf16>
    %c0_5 = arith.constant 0 : index
    %c0_6 = arith.constant 0 : index
    %8 = vector.load %arg4[%c0_5, %c0_6] : memref<128x384xbf16, #tpu.memory_space<vmem>>, vector<128x384xbf16>
    tpu.vector_store %arg4[%c0_5, %c0_6], %7 {strides = array<i32>} : memref<128x384xbf16, #tpu.memory_space<vmem>>, vector<128x384xbf16>,
    %9 = vector.extract_strided_slice %5 {offsets = [0, 384], sizes = [128, 128], strides = [1, 1]} : vector<128x512xf32> to vector<128x128xf32>
    %c0_7 = arith.constant 0 : index
    %c0_8 = arith.constant 0 : index
    %10 = vector.load %arg5[%c0_7, %c0_8] : memref<128x128xf32, #tpu.memory_space<vmem>>, vector<128x128xf32>
    tpu.vector_store %arg5[%c0_7, %c0_8], %9 {strides = array<i32>} : memref<128x128xf32, #tpu.memory_space<vmem>>, vector<128x128xf32>,
    return
  }
  func.func @transform_0(%arg0: i32) -> (i32, i32) {
    %c0_i32 = arith.constant 0 : i32
    %c0_i32_0 = arith.constant 0 : i32
    return %arg0, %c0_i32 : i32, i32
  }
  func.func @transform_1(%arg0: i32) -> (i32, i32) {
    %c0_i32 = arith.constant 0 : i32
    %c0_i32_0 = arith.constant 0 : i32
    %c0_i32_1 = arith.constant 0 : i32
    return %c0_i32, %c0_i32_0 : i32, i32
  }
  func.func @transform_2(%arg0: i32) -> (i32, i32) {
    %c0_i32 = arith.constant 0 : i32
    %c0_i32_0 = arith.constant 0 : i32
    %c0_i32_1 = arith.constant 0 : i32
    return %c0_i32, %c0_i32_0 : i32, i32
  }
  func.func @transform_3(%arg0: i32) -> (i32, i32) {
    %c0_i32 = arith.constant 0 : i32
    %c0_i32_0 = arith.constant 0 : i32
    return %arg0, %c0_i32 : i32, i32
  }
  func.func @transform_4(%arg0: i32) -> (i32, i32) {
    %c0_i32 = arith.constant 0 : i32
    %c0_i32_0 = arith.constant 0 : i32
    return %arg0, %c0_i32 : i32, i32
  }
}

</mosaic_0001>

<llo_original>
// kernel: tpu_custom_call.1
$region0: #{tpu_custom_call.1}
  #allocation0 [shape = 'u32[]', space=smem, size = 0x4, offset = 0x4, fixed_abs, tag = 'smem constant byte address 0x4 - core index']
  #allocation1 [shape = 'u32[72,128]{1,0:T(1,128)}', space=vmem, size = 0x9000, scoped, tag = 'internal scratch']
  %s0 = inlined_call_operand.vmem [shape: bf16[128,32], index: 0, kind: input, shape index: {}]
  %s1 = inlined_call_operand.vmem [shape: bf16[32,512], index: 1, kind: input, shape index: {}]
  %s2 = inlined_call_operand.vmem [shape: f32[1,512], index: 2, kind: input, shape index: {}]
  %s3 = inlined_call_operand.hbm [shape: bf16[128,384], index: 3, kind: output, shape index: {0}]
  %s4 = inlined_call_operand.hbm [shape: f32[128,128], index: 4, kind: output, shape index: {1}]
  %5 = xla_tuple %s3, %s4
  %s6 = sld [smem:[#allocation0]]
  $region30: #{tpu_custom_call.1} parent=0
    _
  %s8 = ssub.s32 1, %s6
  %s9 = scalar_select 0, %s8, %s6
  $region1: #{tpu_custom_call.1} parent=0
    #allocation2 [shape = 'u8[98304]{0}', space=vmem, size = 0x18000, scoped, tag = 'output window, operand 0, single buffered']
    #allocation3 [shape = 's32[1]{0}', space=sflag, size = 0x4, scoped, tag = 'scoped memory for tpu_custom_call.1']
    #allocation4 [shape = 'u8[65536]{0}', space=vmem, size = 0x10000, scoped, tag = 'output window, operand 1, single buffered']
    #allocation5 [shape = 's32[1]{0}', space=sflag, size = 0x4, scoped, tag = 'scoped memory for tpu_custom_call.1']
    %10 = vsyncpa [#allocation3], 0
    %11 = vsyncpa [#allocation5], 0
    // Predicated region
    $region2: #{tpu_custom_call.1} parent=1 // pred_check
      _
    $region3: #{tpu_custom_call.1} parent=1 // pred_check_branch
      %13 = sbr.rel (0) target = $region5
    $region4: #{tpu_custom_call.1} parent=1 // pred_region
      _
    $region5: #{tpu_custom_call.1} parent=1 // pred_fallthru
      _
    // Predicated region
    $region6: #{tpu_custom_call.1} parent=1 // pred_check
      _
    $region7: #{tpu_custom_call.1} parent=1 // pred_check_branch
      %15 = sbr.rel (0) target = $region9
    $region8: #{tpu_custom_call.1} parent=1 // pred_region
      _
    $region9: #{tpu_custom_call.1} parent=1 // pred_fallthru
      _
    // Predicated region
    $region10: #{tpu_custom_call.1} parent=1 // pred_check
      _
    $region11: #{tpu_custom_call.1} parent=1 // pred_check_branch
      %17 = sbr.rel (0) target = $region13
    $region12: #{tpu_custom_call.1} parent=1 // pred_region
      _
    $region13: #{tpu_custom_call.1} parent=1 // pred_fallthru
      _
    %v19 = vld [vmem:[%s0] sm:$0xf]
    %v20 = vld [vmem:[%s0 + $0x4] sm:$0xf]
    %v21 = vld [vmem:[%s0 + $0x8] sm:$0xf]
    %v22 = vld [vmem:[%s0 + $0xc] sm:$0xf]
    %v23 = vld [vmem:[%s0 + $0x10] sm:$0xf]
    %v24 = vld [vmem:[%s0 + $0x14] sm:$0xf]
    %v25 = vld [vmem:[%s0 + $0x18] sm:$0xf]
    %v26 = vld [vmem:[%s0 + $0x1c] sm:$0xf]
    %v27 = vld [vmem:[%s0 + $0x20] sm:$0xf]
    %v28 = vld [vmem:[%s0 + $0x24] sm:$0xf]
    %v29 = vld [vmem:[%s0 + $0x28] sm:$0xf]
    %v30 = vld [vmem:[%s0 + $0x2c] sm:$0xf]
    %v31 = vld [vmem:[%s0 + $0x30] sm:$0xf]
    %v32 = vld [vmem:[%s0 + $0x34] sm:$0xf]
    %v33 = vld [vmem:[%s0 + $0x38] sm:$0xf]
    %v34 = vld [vmem:[%s0 + $0x3c] sm:$0xf]
    %v35 = vld [vmem:[%s1] sm:$0xff]
    %v36 = vld [vmem:[%s1 + $0x8] sm:$0xff]
    %v37 = vld [vmem:[%s1 + $0x10] sm:$0xff]
    %v38 = vld [vmem:[%s1 + $0x18] sm:$0xff]
    %v39 = vld [vmem:[%s1 + $0x20] sm:$0xff]
    %v40 = vld [vmem:[%s1 + $0x28] sm:$0xff]
    %v41 = vld [vmem:[%s1 + $0x30] sm:$0xff]
    %v42 = vld [vmem:[%s1 + $0x38] sm:$0xff]
    %v43 = vld [vmem:[%s2] sm:$0xf]
    %v45 = vperm.slane %v43, 0
    %v46 = vperm.slane %v43, 1
    %v47 = vperm.slane %v43, 2
    %v48 = vperm.slane %v43, 3
    %v69 = vunpack.c.l.b16 %v19
    %v70 = vunpack.c.l.b16 %v20
    %v71 = vunpack.c.l.b16 %v21
    %v72 = vunpack.c.l.b16 %v22
    %v73 = vunpack.c.l.b16 %v23
    %v74 = vunpack.c.l.b16 %v24
    %v75 = vunpack.c.l.b16 %v25
    %v76 = vunpack.c.l.b16 %v26
    %v77 = vunpack.c.l.b16 %v27
    %v78 = vunpack.c.l.b16 %v28
    %v79 = vunpack.c.l.b16 %v29
    %v80 = vunpack.c.l.b16 %v30
    %v81 = vunpack.c.l.b16 %v31
    %v82 = vunpack.c.l.b16 %v32
    %v83 = vunpack.c.l.b16 %v33
    %v84 = vunpack.c.l.b16 %v34
    %v85 = vpack.c.b16 %v70, %v69
    %v86 = vpack.c.b16 %v72, %v71
    %v87 = vpack.c.b16 %v74, %v73
    %v88 = vpack.c.b16 %v76, %v75
    %v89 = vpack.c.b16 %v78, %v77
    %v90 = vpack.c.b16 %v80, %v79
    %v91 = vpack.c.b16 %v82, %v81
    %v92 = vpack.c.b16 %v84, %v83
    %v101 = vunpack.c.l.b16 %v35
    %v102 = vunpack.c.h.b16 %v35
    %v103 = vunpack.c.l.b16 %v36
    %v104 = vunpack.c.h.b16 %v36
    %v105 = vunpack.c.l.b16 %v37
    %v106 = vunpack.c.h.b16 %v37
    %v107 = vunpack.c.l.b16 %v38
    %v108 = vunpack.c.h.b16 %v38
    %v109 = vunpack.c.l.b16 %v39
    %v110 = vunpack.c.h.b16 %v39
    %v111 = vunpack.c.l.b16 %v40
    %v112 = vunpack.c.h.b16 %v40
    %v113 = vunpack.c.l.b16 %v41
    %v114 = vunpack.c.h.b16 %v41
    %v115 = vunpack.c.l.b16 %v42
    %v116 = vunpack.c.h.b16 %v42
    %v117 = vpack.c.b16 %v105, %v101
    %v118 = vpack.c.b16 %v106, %v102
    %v119 = vpack.c.b16 %v107, %v103
    %v120 = vpack.c.b16 %v108, %v104
    %v121 = vpack.c.b16 %v113, %v109
    %v122 = vpack.c.b16 %v114, %v110
    %v123 = vpack.c.b16 %v115, %v111
    %v124 = vpack.c.b16 %v116, %v112
    %vm133 = vcmask 261120
    %v135 = vsel %vm133, %v85, 0
    %v138 = vsel %vm133, %v86, 0
    %v141 = vsel %vm133, %v87, 0
    %v144 = vsel %vm133, %v88, 0
    %v147 = vsel %vm133, %v89, 0
    %v150 = vsel %vm133, %v90, 0
    %v153 = vsel %vm133, %v91, 0
    %v156 = vsel %vm133, %v92, 0
    %158 = vmatpush.bf16.msra.mxu0 0
    %159 = vmatpush.bf16.msra.mxu0 0
    %160 = vmatpush.bf16.msra.mxu0 0
    %161 = vmatpush.bf16.msra.mxu0 0
    %162 = vmatpush.bf16.msra.mxu0 0
    %163 = vmatpush.bf16.msra.mxu0 0
    %164 = vmatpush.bf16.msra.mxu0 %v121
    %165 = vmatpush.bf16.msra.mxu0 %v117
    %166 = vmatmul.bf16.gmra.mxu0 %v135
    %v167 = vpop.f32.mrf.mxu0
    %v168 = vadd.f32 %v45, %v167
    %v169 = vpop.f32.mrf.mxu0
    %v170 = vadd.f32 %v45, %v169
    %171 = vmatmul.bf16.gmra.mxu0 %v138
    %v172 = vpop.f32.mrf.mxu0
    %v173 = vadd.f32 %v45, %v172
    %v174 = vpop.f32.mrf.mxu0
    %v175 = vadd.f32 %v45, %v174
    %176 = vmatmul.bf16.gmra.mxu0 %v141
    %v177 = vpop.f32.mrf.mxu0
    %v178 = vadd.f32 %v45, %v177
    %v179 = vpop.f32.mrf.mxu0
    %v180 = vadd.f32 %v45, %v179
    %181 = vmatmul.bf16.gmra.mxu0 %v144
    %v182 = vpop.f32.mrf.mxu0
    %v183 = vadd.f32 %v45, %v182
    %v184 = vpop.f32.mrf.mxu0
    %v185 = vadd.f32 %v45, %v184
    %186 = vmatmul.bf16.gmra.mxu0 %v147
    %v187 = vpop.f32.mrf.mxu0
    %v188 = vadd.f32 %v45, %v187
    %v189 = vpop.f32.mrf.mxu0
    %v190 = vadd.f32 %v45, %v189
    %191 = vmatmul.bf16.gmra.mxu0 %v150
    %v192 = vpop.f32.mrf.mxu0
    %v193 = vadd.f32 %v45, %v192
    %v194 = vpop.f32.mrf.mxu0
    %v195 = vadd.f32 %v45, %v194
    %196 = vmatmul.bf16.gmra.mxu0 %v153
    %v197 = vpop.f32.mrf.mxu0
    %v198 = vadd.f32 %v45, %v197
    %v199 = vpop.f32.mrf.mxu0
    %v200 = vadd.f32 %v45, %v199
    %201 = vmatmul.bf16.gmra.mxu0 %v156
    %v202 = vpop.f32.mrf.mxu0
    %v203 = vadd.f32 %v45, %v202
    %v204 = vpop.f32.mrf.mxu0
    %v205 = vadd.f32 %v45, %v204
    %206 = vdwg.mxu0
    %207 = vmatpush.bf16.msra.mxu0 0
    %208 = vmatpush.bf16.msra.mxu0 0
    %209 = vmatpush.bf16.msra.mxu0 0
    %210 = vmatpush.bf16.msra.mxu0 0
    %211 = vmatpush.bf16.msra.mxu0 0
    %212 = vmatpush.bf16.msra.mxu0 0
    %213 = vmatpush.bf16.msra.mxu0 %v122
    %214 = vmatpush.bf16.msra.mxu0 %v118
    %215 = vmatmul.bf16.gmra.mxu0 %v135
    %v216 = vpop.f32.mrf.mxu0
    %v217 = vadd.f32 %v46, %v216
    %v218 = vpop.f32.mrf.mxu0
    %v219 = vadd.f32 %v46, %v218
    %220 = vmatmul.bf16.gmra.mxu0 %v138
    %v221 = vpop.f32.mrf.mxu0
    %v222 = vadd.f32 %v46, %v221
    %v223 = vpop.f32.mrf.mxu0
    %v224 = vadd.f32 %v46, %v223
    %225 = vmatmul.bf16.gmra.mxu0 %v141
    %v226 = vpop.f32.mrf.mxu0
    %v227 = vadd.f32 %v46, %v226
    %v228 = vpop.f32.mrf.mxu0
    %v229 = vadd.f32 %v46, %v228
    %230 = vmatmul.bf16.gmra.mxu0 %v144
    %v231 = vpop.f32.mrf.mxu0
    %v232 = vadd.f32 %v46, %v231
    %v233 = vpop.f32.mrf.mxu0
    %v234 = vadd.f32 %v46, %v233
    %235 = vmatmul.bf16.gmra.mxu0 %v147
    %v236 = vpop.f32.mrf.mxu0
    %v237 = vadd.f32 %v46, %v236
    %v238 = vpop.f32.mrf.mxu0
    %v239 = vadd.f32 %v46, %v238
    %240 = vmatmul.bf16.gmra.mxu0 %v150
    %v241 = vpop.f32.mrf.mxu0
    %v242 = vadd.f32 %v46, %v241
    %v243 = vpop.f32.mrf.mxu0
    %v244 = vadd.f32 %v46, %v243
    %245 = vmatmul.bf16.gmra.mxu0 %v153
    %v246 = vpop.f32.mrf.mxu0
    %v247 = vadd.f32 %v46, %v246
    %v248 = vpop.f32.mrf.mxu0
    %v249 = vadd.f32 %v46, %v248
    %250 = vmatmul.bf16.gmra.mxu0 %v156
    %v251 = vpop.f32.mrf.mxu0
    %v252 = vadd.f32 %v46, %v251
    %v253 = vpop.f32.mrf.mxu0
    %v254 = vadd.f32 %v46, %v253
    %255 = vdwg.mxu0
    %256 = vmatpush.bf16.msra.mxu0 0
    %257 = vmatpush.bf16.msra.mxu0 0
    %258 = vmatpush.bf16.msra.mxu0 0
    %259 = vmatpush.bf16.msra.mxu0 0
    %260 = vmatpush.bf16.msra.mxu0 0
    %261 = vmatpush.bf16.msra.mxu0 0
    %262 = vmatpush.bf16.msra.mxu0 %v123
    %263 = vmatpush.bf16.msra.mxu0 %v119
    %264 = vmatmul.bf16.gmra.mxu0 %v135
    %v265 = vpop.f32.mrf.mxu0
    %v266 = vadd.f32 %v47, %v265
    %v267 = vpop.f32.mrf.mxu0
    %v268 = vadd.f32 %v47, %v267
    %269 = vmatmul.bf16.gmra.mxu0 %v138
    %v270 = vpop.f32.mrf.mxu0
    %v271 = vadd.f32 %v47, %v270
    %v272 = vpop.f32.mrf.mxu0
    %v273 = vadd.f32 %v47, %v272
    %274 = vmatmul.bf16.gmra.mxu0 %v141
    %v275 = vpop.f32.mrf.mxu0
    %v276 = vadd.f32 %v47, %v275
    %v277 = vpop.f32.mrf.mxu0
    %v278 = vadd.f32 %v47, %v277
    %279 = vmatmul.bf16.gmra.mxu0 %v144
    %v280 = vpop.f32.mrf.mxu0
    %v281 = vadd.f32 %v47, %v280
    %v282 = vpop.f32.mrf.mxu0
    %v283 = vadd.f32 %v47, %v282
    %284 = vmatmul.bf16.gmra.mxu0 %v147
    %v285 = vpop.f32.mrf.mxu0
    %v286 = vadd.f32 %v47, %v285
    %v287 = vpop.f32.mrf.mxu0
    %v288 = vadd.f32 %v47, %v287
    %289 = vmatmul.bf16.gmra.mxu0 %v150
    %v290 = vpop.f32.mrf.mxu0
    %v291 = vadd.f32 %v47, %v290
    %v292 = vpop.f32.mrf.mxu0
    %v293 = vadd.f32 %v47, %v292
    %294 = vmatmul.bf16.gmra.mxu0 %v153
    %v295 = vpop.f32.mrf.mxu0
    %v296 = vadd.f32 %v47, %v295
    %v297 = vpop.f32.mrf.mxu0
    %v298 = vadd.f32 %v47, %v297
    %299 = vmatmul.bf16.gmra.mxu0 %v156
    %v300 = vpop.f32.mrf.mxu0
    %v301 = vadd.f32 %v47, %v300
    %v302 = vpop.f32.mrf.mxu0
    %v303 = vadd.f32 %v47, %v302
    %304 = vdwg.mxu0
    %305 = vmatpush.bf16.msra.mxu0 0
    %306 = vmatpush.bf16.msra.mxu0 0
    %307 = vmatpush.bf16.msra.mxu0 0
    %308 = vmatpush.bf16.msra.mxu0 0
    %309 = vmatpush.bf16.msra.mxu0 0
    %310 = vmatpush.bf16.msra.mxu0 0
    %311 = vmatpush.bf16.msra.mxu0 %v124
    %312 = vmatpush.bf16.msra.mxu0 %v120
    %313 = vmatmul.bf16.gmra.mxu0 %v135
    %v314 = vpop.f32.mrf.mxu0
    %v315 = vadd.f32 %v48, %v314
    %v316 = vpop.f32.mrf.mxu0
    %v317 = vadd.f32 %v48, %v316
    %318 = vmatmul.bf16.gmra.mxu0 %v138
    %v319 = vpop.f32.mrf.mxu0
    %v320 = vadd.f32 %v48, %v319
    %v321 = vpop.f32.mrf.mxu0
    %v322 = vadd.f32 %v48, %v321
    %323 = vmatmul.bf16.gmra.mxu0 %v141
    %v324 = vpop.f32.mrf.mxu0
    %v325 = vadd.f32 %v48, %v324
    %v326 = vpop.f32.mrf.mxu0
    %v327 = vadd.f32 %v48, %v326
    %328 = vmatmul.bf16.gmra.mxu0 %v144
    %v329 = vpop.f32.mrf.mxu0
    %v330 = vadd.f32 %v48, %v329
    %v331 = vpop.f32.mrf.mxu0
    %v332 = vadd.f32 %v48, %v331
    %333 = vmatmul.bf16.gmra.mxu0 %v147
    %v334 = vpop.f32.mrf.mxu0
    %v335 = vadd.f32 %v48, %v334
    %v336 = vpop.f32.mrf.mxu0
    %v337 = vadd.f32 %v48, %v336
    %338 = vmatmul.bf16.gmra.mxu0 %v150
    %v339 = vpop.f32.mrf.mxu0
    %v340 = vadd.f32 %v48, %v339
    %v341 = vpop.f32.mrf.mxu0
    %v342 = vadd.f32 %v48, %v341
    %343 = vmatmul.bf16.gmra.mxu0 %v153
    %v344 = vpop.f32.mrf.mxu0
    %v345 = vadd.f32 %v48, %v344
    %v346 = vpop.f32.mrf.mxu0
    %v347 = vadd.f32 %v48, %v346
    %348 = vmatmul.bf16.gmra.mxu0 %v156
    %v349 = vpop.f32.mrf.mxu0
    %v350 = vadd.f32 %v48, %v349
    %v351 = vpop.f32.mrf.mxu0
    %v352 = vadd.f32 %v48, %v351
    %353 = vdwg.mxu0
    %v354 = vpack.c.bf16 %v217, %v168
    %v355 = vpack.c.bf16 %v266, %v266
    %v356 = vpack.c.bf16 %v219, %v170
    %v357 = vpack.c.bf16 %v268, %v268
    %v358 = vpack.c.bf16 %v222, %v173
    %v359 = vpack.c.bf16 %v271, %v271
    %v360 = vpack.c.bf16 %v224, %v175
    %v361 = vpack.c.bf16 %v273, %v273
    %v362 = vpack.c.bf16 %v227, %v178
    %v363 = vpack.c.bf16 %v276, %v276
    %v364 = vpack.c.bf16 %v229, %v180
    %v365 = vpack.c.bf16 %v278, %v278
    %v366 = vpack.c.bf16 %v232, %v183
    %v367 = vpack.c.bf16 %v281, %v281
    %v368 = vpack.c.bf16 %v234, %v185
    %v369 = vpack.c.bf16 %v283, %v283
    %v370 = vpack.c.bf16 %v237, %v188
    %v371 = vpack.c.bf16 %v286, %v286
    %v372 = vpack.c.bf16 %v239, %v190
    %v373 = vpack.c.bf16 %v288, %v288
    %v374 = vpack.c.bf16 %v242, %v193
    %v375 = vpack.c.bf16 %v291, %v291
    %v376 = vpack.c.bf16 %v244, %v195
    %v377 = vpack.c.bf16 %v293, %v293
    %v378 = vpack.c.bf16 %v247, %v198
    %v379 = vpack.c.bf16 %v296, %v296
    %v380 = vpack.c.bf16 %v249, %v200
    %v381 = vpack.c.bf16 %v298, %v298
    %v382 = vpack.c.bf16 %v252, %v203
    %v383 = vpack.c.bf16 %v301, %v301
    %v384 = vpack.c.bf16 %v254, %v205
    %v385 = vpack.c.bf16 %v303, %v303
    %386 = vst [vmem:[#allocation2] sm:$0xff] %v354
    %387 = vst [vmem:[#allocation2 + $0x8] sm:$0xf] %v355
    %388 = vst [vmem:[#allocation2 + $0xc] sm:$0xff] %v356
    %389 = vst [vmem:[#allocation2 + $0x14] sm:$0xf] %v357
    %390 = vst [vmem:[#allocation2 + $0x18] sm:$0xff] %v358
    %391 = vst [vmem:[#allocation2 + $0x20] sm:$0xf] %v359
    %392 = vst [vmem:[#allocation2 + $0x24] sm:$0xff] %v360
    %393 = vst [vmem:[#allocation2 + $0x2c] sm:$0xf] %v361
    %394 = vst [vmem:[#allocation2 + $0x30] sm:$0xff] %v362
    %395 = vst [vmem:[#allocation2 + $0x38] sm:$0xf] %v363
    %396 = vst [vmem:[#allocation2 + $0x3c] sm:$0xff] %v364
    %397 = vst [vmem:[#allocation2 + $0x44] sm:$0xf] %v365
    %398 = vst [vmem:[#allocation2 + $0x48] sm:$0xff] %v366
    %399 = vst [vmem:[#allocation2 + $0x50] sm:$0xf] %v367
    %400 = vst [vmem:[#allocation2 + $0x54] sm:$0xff] %v368
    %401 = vst [vmem:[#allocation2 + $0x5c] sm:$0xf] %v369
    %402 = vst [vmem:[#allocation2 + $0x60] sm:$0xff] %v370
    %403 = vst [vmem:[#allocation2 + $0x68] sm:$0xf] %v371
    %404 = vst [vmem:[#allocation2 + $0x6c] sm:$0xff] %v372
    %405 = vst [vmem:[#allocation2 + $0x74] sm:$0xf] %v373
    %406 = vst [vmem:[#allocation2 + $0x78] sm:$0xff] %v374
    %407 = vst [vmem:[#allocation2 + $0x80] sm:$0xf] %v375
    %408 = vst [vmem:[#allocation2 + $0x84] sm:$0xff] %v376
    %409 = vst [vmem:[#allocation2 + $0x8c] sm:$0xf] %v377
    %410 = vst [vmem:[#allocation2 + $0x90] sm:$0xff] %v378
    %411 = vst [vmem:[#allocation2 + $0x98] sm:$0xf] %v379
    %412 = vst [vmem:[#allocation2 + $0x9c] sm:$0xff] %v380
    %413 = vst [vmem:[#allocation2 + $0xa4] sm:$0xf] %v381
    %414 = vst [vmem:[#allocation2 + $0xa8] sm:$0xff] %v382
    %415 = vst [vmem:[#allocation2 + $0xb0] sm:$0xf] %v383
    %416 = vst [vmem:[#allocation2 + $0xb4] sm:$0xff] %v384
    %417 = vst [vmem:[#allocation2 + $0xbc] sm:$0xf] %v385
    %418 = vst [vmem:[#allocation4] sm:$0xff] %v315
    %419 = vst [vmem:[#allocation4 + $0x8] sm:$0xff] %v317
    %420 = vst [vmem:[#allocation4 + $0x10] sm:$0xff] %v320
    %421 = vst [vmem:[#allocation4 + $0x18] sm:$0xff] %v322
    %422 = vst [vmem:[#allocation4 + $0x20] sm:$0xff] %v325
    %423 = vst [vmem:[#allocation4 + $0x28] sm:$0xff] %v327
    %424 = vst [vmem:[#allocation4 + $0x30] sm:$0xff] %v330
    %425 = vst [vmem:[#allocation4 + $0x38] sm:$0xff] %v332
    %426 = vst [vmem:[#allocation4 + $0x40] sm:$0xff] %v335
    %427 = vst [vmem:[#allocation4 + $0x48] sm:$0xff] %v337
    %428 = vst [vmem:[#allocation4 + $0x50] sm:$0xff] %v340
    %429 = vst [vmem:[#allocation4 + $0x58] sm:$0xff] %v342
    %430 = vst [vmem:[#allocation4 + $0x60] sm:$0xff] %v345
    %431 = vst [vmem:[#allocation4 + $0x68] sm:$0xff] %v347
    %432 = vst [vmem:[#allocation4 + $0x70] sm:$0xff] %v350
    %433 = vst [vmem:[#allocation4 + $0x78] sm:$0xff] %v352
    // Predicated region
    $region14: #{tpu_custom_call.1} parent=1 // pred_check
      _
    $region15: #{tpu_custom_call.1} parent=1 // pred_check_branch
      %435 = sbr.rel (0) target = $region17
    $region16: #{tpu_custom_call.1} parent=1 // pred_region
      %437 = vsyncadd [#allocation3], 0
      %s438 = sshll.u32 [#allocation2], 4
      %s439 = int_to_ptr.vmem [resolvable:$true] %s438
      %s440 = sshll.u32 %s3, 4
      %s441 = int_to_ptr.hbm [resolvable:$true] %s440
      %446 = dma.vmem_to_hbm [thread:$0]  %s439, 3072, %s441, [#allocation3], 192, 192, 12
    $region17: #{tpu_custom_call.1} parent=1 // pred_fallthru
      _
    // Predicated region
    $region18: #{tpu_custom_call.1} parent=1 // pred_check
      _
    $region19: #{tpu_custom_call.1} parent=1 // pred_check_branch
      %448 = sbr.rel (0) target = $region21
    $region20: #{tpu_custom_call.1} parent=1 // pred_region
      %450 = vsyncadd [#allocation5], 0
      %s451 = sshll.u32 [#allocation4], 4
      %s452 = int_to_ptr.vmem [resolvable:$true] %s451
      %s453 = sshll.u32 %s4, 4
      %s454 = int_to_ptr.hbm [resolvable:$true] %s453
      %459 = dma.vmem_to_hbm [thread:$0]  %s452, 2048, %s454, [#allocation5], 128, 128, 8
    $region21: #{tpu_custom_call.1} parent=1 // pred_fallthru
      _
    // Predicated region
    $region22: #{tpu_custom_call.1} parent=1 // pred_check
      _
    $region23: #{tpu_custom_call.1} parent=1 // pred_check_branch
      %461 = sbr.rel (0) target = $region25
    $region24: #{tpu_custom_call.1} parent=1 // pred_region
      %463 = dma.done [#allocation3], 3072
    $region25: #{tpu_custom_call.1} parent=1 // pred_fallthru
      _
    // Predicated region
    $region26: #{tpu_custom_call.1} parent=1 // pred_check
      _
    $region27: #{tpu_custom_call.1} parent=1 // pred_check_branch
      %465 = sbr.rel (0) target = $region29
    $region28: #{tpu_custom_call.1} parent=1 // pred_region
      %467 = dma.done [#allocation5], 2048
    $region29: #{tpu_custom_call.1} parent=1 // pred_fallthru
      _
    %468 = vsyncpa [#allocation3], 1
    %469 = vsyncpa [#allocation5], 1

</llo_original>
